<compile_context>
chip_gen: v5e
topology: v5e:2x2
jax: 0.10.0
libtpu: 0.0.40
codegen_flags: <defaults>
</compile_context>

<pallas_src>
import functools

import jax
import jax.numpy as jnp
from jax.experimental import pallas as pl
from jax.experimental.pallas import tpu as pltpu

SMOOTH = 1e-05
ALPHA = 0.5
GAMMA = 2.0   # gamma == 2 -> pow implemented as a single multiply

LANES = 512            # lane-dense last dim (multiple of 128)
MAX_BLOCK_ROWS = 512   # 512 x 512 x 4 B = 1 MiB per input per pipeline buffer


def _round_up(x, m):
    return (x + m - 1) // m * m


def _focal_loss_kernel(cls_ref, tgt_ref, out_ref, *, block_rows, n_valid,
                       needs_mask):
    logits = cls_ref[...].astype(jnp.float32)    # (block_rows, LANES)
    target = tgt_ref[...].astype(jnp.float32)

    # nn.Sigmoid()(classifications)
    classification = jax.nn.sigmoid(logits)

    is_pos = target == 1.0
    alpha_factor = jnp.where(is_pos, ALPHA, 1.0 - ALPHA)
    focal_weight = jnp.where(is_pos, 1.0 - classification, classification)
    focal_weight = alpha_factor * (focal_weight * focal_weight)   # pow(., 2)

    bce = -(target * jnp.log(classification + SMOOTH)
            + (1.0 - target) * jnp.log(1.0 - classification + SMOOTH))
    cls_loss = focal_weight * bce                 # (block_rows, LANES)

    if needs_mask:
        # Zero out wrapper padding (only the tail block has any; the
        # compare+select is cheap VPU work against the EUP-heavy loss math).
        j = pl.program_id(0)
        row_ids = jax.lax.broadcasted_iota(jnp.int32, cls_loss.shape, 0)
        lane_ids = jax.lax.broadcasted_iota(jnp.int32, cls_loss.shape, 1)
        gidx = (j * block_rows + row_ids) * LANES + lane_ids
        cls_loss = jnp.where(gidx < n_valid, cls_loss, 0.0)

    # Fold (block_rows, LANES) -> (8, LANES) partial sums with sublane-aligned
    # static slices + VPU adds; one lane-dense store per grid step.
    partial = cls_loss[0:8, :]
    for r in range(1, block_rows // 8):
        partial = partial + cls_loss[r * 8:(r + 1) * 8, :]
    out_ref[...] = partial


def focal_loss(classifications, targets):
    """Forward pass of FocalLoss; returns a scalar f32 loss."""
    # Glue: squeeze the singleton N/C dims and flatten to a lane-dense slab.
    cls = classifications.reshape(-1)
    tgt = targets.reshape(-1)
    n_valid = cls.shape[0]

    rows_needed = pl.cdiv(n_valid, LANES)
    block_rows = min(MAX_BLOCK_ROWS, _round_up(rows_needed, 8))
    rows_padded = _round_up(rows_needed, block_rows)
    n_padded = rows_padded * LANES
    needs_mask = n_padded != n_valid

    if needs_mask:
        cls = jnp.pad(cls, (0, n_padded - n_valid))
        tgt = jnp.pad(tgt, (0, n_padded - n_valid))
    cls2 = cls.reshape(rows_padded, LANES)
    tgt2 = tgt.reshape(rows_padded, LANES)

    num_blocks = rows_padded // block_rows

    kernel = functools.partial(
        _focal_loss_kernel,
        block_rows=block_rows, n_valid=n_valid, needs_mask=needs_mask)

    partials = pl.pallas_call(
        kernel,
        out_shape=jax.ShapeDtypeStruct((num_blocks * 8, LANES), jnp.float32),
        grid_spec=pltpu.PrefetchScalarGridSpec(
            num_scalar_prefetch=0,
            grid=(num_blocks,),
            in_specs=[
                pl.BlockSpec((block_rows, LANES), lambda j: (j, 0)),
                pl.BlockSpec((block_rows, LANES), lambda j: (j, 0)),
            ],
            out_specs=pl.BlockSpec((8, LANES), lambda j: (j, 0)),
        ),
        compiler_params=pltpu.CompilerParams(
            dimension_semantics=("parallel",),
            vmem_limit_bytes=32 * 1024 * 1024,
        ),
    )(cls2, tgt2)

    # Tiny wrapper epilogue: reduce the per-block (8, LANES) partial sums.
    # mean-of-equal-size-slice-means == global sum / (D*H*W).
    return jnp.sum(partials) / jnp.float32(n_valid)


def focal_loss_ref(classifications, targets):
    """Pure-JAX reference mirroring the PyTorch forward exactly."""
    c = jax.nn.sigmoid(classifications.astype(jnp.float32))
    c = c.reshape(classifications.shape[-3:])
    t = targets.astype(jnp.float32).reshape(targets.shape[-3:])
    alpha_factor = jnp.where(t == 1.0, ALPHA, 1.0 - ALPHA)
    focal_weight = jnp.where(t == 1.0, 1.0 - c, c)
    focal_weight = alpha_factor * focal_weight ** GAMMA
    bce = -(t * jnp.log(c + SMOOTH) + (1.0 - t) * jnp.log(1.0 - c + SMOOTH))
    cls_loss = focal_weight * bce
    return jnp.mean(jnp.mean(cls_loss, axis=(1, 2)))


if __name__ == "__main__":
    key = jax.random.PRNGKey(0)
    k1, k2 = jax.random.split(key)

    D, H, W = 8, 16, 16
    # classifications are raw logits (sigmoid is applied inside the forward)
    classifications = jax.random.normal(k1, (1, 1, D, H, W), dtype=jnp.float32)
    # targets are binary {0, 1}
    targets = jax.random.bernoulli(k2, 0.3, (1, 1, D, H, W)).astype(jnp.float32)

    loss = jax.block_until_ready(focal_loss(classifications, targets))
    ref = jax.block_until_ready(focal_loss_ref(classifications, targets))

    assert jnp.allclose(loss, ref, rtol=1e-5, atol=1e-6), (loss, ref)
    print("KERNEL_OK")
</pallas_src>

<mosaic_0001>
module attributes {stable_mosaic.version = 11 : i64} {
  func.func @_focal_loss_kernel(%arg0: i32, %arg1: memref<8x512xf32, #tpu.memory_space<vmem>>, %arg2: memref<8x512xf32, #tpu.memory_space<vmem>>, %arg3: memref<8x512xf32, #tpu.memory_space<vmem>>) attributes {dimension_semantics = [#tpu.dimension_semantics<parallel>], iteration_bounds = array<i64: 1>, scalar_prefetch = 0 : i64, scratch_operands = 0 : i64, tpu.core_type = #tpu.core_type<tc>, window_params = [{transform_indices = @transform_0, window_bounds = array<i64: 8, 512>}, {transform_indices = @transform_1, window_bounds = array<i64: 8, 512>}, {transform_indices = @transform_2, window_bounds = array<i64: 8, 512>}]} {
    %c0 = arith.constant 0 : index
    %c0_0 = arith.constant 0 : index
    %0 = vector.load %arg1[%c0, %c0_0] : memref<8x512xf32, #tpu.memory_space<vmem>>, vector<8x512xf32>
    %c0_1 = arith.constant 0 : index
    %c0_2 = arith.constant 0 : index
    %1 = vector.load %arg2[%c0_1, %c0_2] : memref<8x512xf32, #tpu.memory_space<vmem>>, vector<8x512xf32>
    %2 = arith.negf %0 : vector<8x512xf32>
    %3 = math.exp %2 : vector<8x512xf32>
    %cst = arith.constant 1.000000e+00 : f32
    %4 = vector.broadcast %cst : f32 to vector<8x512xf32>
    %5 = arith.addf %4, %3 : vector<8x512xf32>
    %6 = arith.divf %4, %5 : vector<8x512xf32>
    %cst_3 = arith.constant 1.000000e+00 : f32
    %7 = vector.broadcast %cst_3 : f32 to vector<8x512xf32>
    %8 = arith.cmpf oeq, %1, %7 : vector<8x512xf32>
    %cst_4 = arith.constant 5.000000e-01 : f32
    %cst_5 = arith.constant 5.000000e-01 : f32
    %9 = vector.broadcast %cst_4 : f32 to vector<8x512xf32>
    %10 = vector.broadcast %cst_5 : f32 to vector<8x512xf32>
    %11 = arith.select %8, %9, %10 : vector<8x512xi1>, vector<8x512xf32>
    %cst_6 = arith.constant 1.000000e+00 : f32
    %12 = vector.broadcast %cst_6 : f32 to vector<8x512xf32>
    %13 = arith.subf %12, %6 : vector<8x512xf32>
    %14 = arith.select %8, %13, %6 : vector<8x512xi1>, vector<8x512xf32>
    %15 = arith.mulf %14, %14 : vector<8x512xf32>
    %16 = arith.mulf %11, %15 : vector<8x512xf32>
    %cst_7 = arith.constant 9.99999974E-6 : f32
    %17 = vector.broadcast %cst_7 : f32 to vector<8x512xf32>
    %18 = arith.addf %6, %17 : vector<8x512xf32>
    %19 = math.log %18 : vector<8x512xf32>
    %20 = arith.mulf %1, %19 : vector<8x512xf32>
    %cst_8 = arith.constant 1.000000e+00 : f32
    %21 = vector.broadcast %cst_8 : f32 to vector<8x512xf32>
    %22 = arith.subf %21, %1 : vector<8x512xf32>
    %cst_9 = arith.constant 1.000000e+00 : f32
    %23 = vector.broadcast %cst_9 : f32 to vector<8x512xf32>
    %24 = arith.subf %23, %6 : vector<8x512xf32>
    %cst_10 = arith.constant 9.99999974E-6 : f32
    %25 = vector.broadcast %cst_10 : f32 to vector<8x512xf32>
    %26 = arith.addf %24, %25 : vector<8x512xf32>
    %27 = math.log %26 : vector<8x512xf32>
    %28 = arith.mulf %22, %27 : vector<8x512xf32>
    %29 = arith.addf %20, %28 : vector<8x512xf32>
    %cst_11 = arith.constant 0.000000e+00 : f32
    %30 = vector.broadcast %cst_11 : f32 to vector<8x512xf32>
    %31 = arith.subf %30, %29 : vector<8x512xf32>
    %32 = arith.mulf %16, %31 : vector<8x512xf32>
    %33 = tpu.iota {dimensions = array<i32: 0>} : vector<8x512xi32>
    %34 = tpu.iota {dimensions = array<i32: 1>} : vector<8x512xi32>
    %c8_i32 = arith.constant 8 : i32
    %35 = arith.muli %arg0, %c8_i32 : i32
    %36 = vector.broadcast %35 : i32 to vector<8x512xi32>
    %37 = arith.addi %36, %33 : vector<8x512xi32>
    %c512_i32 = arith.constant 512 : i32
    %38 = vector.broadcast %c512_i32 : i32 to vector<8x512xi32>
    %39 = arith.muli %37, %38 : vector<8x512xi32>
    %40 = arith.addi %39, %34 : vector<8x512xi32>
    %c2048_i32 = arith.constant 2048 : i32
    %41 = vector.broadcast %c2048_i32 : i32 to vector<8x512xi32>
    %42 = arith.cmpi slt, %40, %41 : vector<8x512xi32>
    %cst_12 = arith.constant 0.000000e+00 : f32
    %43 = vector.broadcast %cst_12 : f32 to vector<8x512xf32>
    %44 = arith.select %42, %32, %43 : vector<8x512xi1>, vector<8x512xf32>
    %c0_13 = arith.constant 0 : index
    %c0_14 = arith.constant 0 : index
    %45 = vector.load %arg3[%c0_13, %c0_14] : memref<8x512xf32, #tpu.memory_space<vmem>>, vector<8x512xf32>
    tpu.vector_store %arg3[%c0_13, %c0_14], %44 {strides = array<i32>} : memref<8x512xf32, #tpu.memory_space<vmem>>, vector<8x512xf32>,
    return
  }
  func.func @transform_0(%arg0: i32) -> (i32, i32) {
    %c0_i32 = arith.constant 0 : i32
    %c0_i32_0 = arith.constant 0 : i32
    return %arg0, %c0_i32 : i32, i32
  }
  func.func @transform_1(%arg0: i32) -> (i32, i32) {
    %c0_i32 = arith.constant 0 : i32
    %c0_i32_0 = arith.constant 0 : i32
    return %arg0, %c0_i32 : i32, i32
  }
  func.func @transform_2(%arg0: i32) -> (i32, i32) {
    %c0_i32 = arith.constant 0 : i32
    %c0_i32_0 = arith.constant 0 : i32
    return %arg0, %c0_i32 : i32, i32
  }
}

</mosaic_0001>

<llo_original>
// kernel: tpu_custom_call.1
$region0: #{tpu_custom_call.1}
  #allocation0 [shape = 'u32[]', space=smem, size = 0x4, offset = 0x4, fixed_abs, tag = 'smem constant byte address 0x4 - core index']
  #allocation1 [shape = 'u32[72,128]{1,0:T(1,128)}', space=vmem, size = 0x9000, scoped, tag = 'internal scratch']
  %s0 = inlined_call_operand.hbm [shape: f32[8,512], index: 0, kind: input, shape index: {}]
  %s1 = inlined_call_operand.hbm [shape: f32[8,512], index: 1, kind: input, shape index: {}]
  %s2 = inlined_call_operand.hbm [shape: f32[8,512], index: 2, kind: output, shape index: {}]
  %s3 = sld [smem:[#allocation0]]
  $region26: #{tpu_custom_call.1} parent=0
    _
  %s5 = ssub.s32 1, %s3
  %s6 = scalar_select 0, %s5, %s3
  $region1: #{tpu_custom_call.1} parent=0
    #allocation2 [shape = 'u8[16384]{0}', space=vmem, size = 0x4000, scoped, tag = 'input window, operand 0, single buffered']
    #allocation3 [shape = 's32[1]{0}', space=sflag, size = 0x4, scoped, tag = 'scoped memory for tpu_custom_call.1']
    #allocation4 [shape = 's32[1]{0}', space=sflag, size = 0x4, scoped, tag = 'scoped memory for tpu_custom_call.1']
    #allocation5 [shape = 'u8[16384]{0}', space=vmem, size = 0x4000, scoped, tag = 'input window, operand 1, single buffered']
    #allocation6 [shape = 's32[1]{0}', space=sflag, size = 0x4, scoped, tag = 'scoped memory for tpu_custom_call.1']
    #allocation7 [shape = 'u8[16384]{0}', space=vmem, size = 0x4000, scoped, tag = 'output window, operand 0, single buffered']
    %7 = vsyncpa [#allocation3], 0
    %8 = vsyncpa [#allocation6], 0
    %9 = vsyncpa [#allocation4], 0
    // Predicated region
    $region2: #{tpu_custom_call.1} parent=1 // pred_check
      _
    $region3: #{tpu_custom_call.1} parent=1 // pred_check_branch
      %11 = sbr.rel (0) target = $region5
    $region4: #{tpu_custom_call.1} parent=1 // pred_region
      %13 = vsyncadd [#allocation3], 0
      %s15 = sshll.u32 %s0, 4
      %s16 = int_to_ptr.hbm [resolvable:$true] %s15
      %s17 = sshll.u32 [#allocation2], 4
      %s18 = int_to_ptr.vmem [resolvable:$true] %s17
      %20 = dma.hbm_to_vmem [thread:$0]  %s16, 512, %s18, [#allocation3]
    $region5: #{tpu_custom_call.1} parent=1 // pred_fallthru
      _
    // Predicated region
    $region6: #{tpu_custom_call.1} parent=1 // pred_check
      _
    $region7: #{tpu_custom_call.1} parent=1 // pred_check_branch
      %22 = sbr.rel (0) target = $region9
    $region8: #{tpu_custom_call.1} parent=1 // pred_region
      %24 = vsyncadd [#allocation6], 0
      %s26 = sshll.u32 %s1, 4
      %s27 = int_to_ptr.hbm [resolvable:$true] %s26
      %s28 = sshll.u32 [#allocation5], 4
      %s29 = int_to_ptr.vmem [resolvable:$true] %s28
      %31 = dma.hbm_to_vmem [thread:$0]  %s27, 512, %s29, [#allocation6]
    $region9: #{tpu_custom_call.1} parent=1 // pred_fallthru
      _
    // Predicated region
    $region10: #{tpu_custom_call.1} parent=1 // pred_check
      _
    $region11: #{tpu_custom_call.1} parent=1 // pred_check_branch
      %33 = sbr.rel (0) target = $region13
    $region12: #{tpu_custom_call.1} parent=1 // pred_region
      %35 = dma.done [#allocation3], 512
    $region13: #{tpu_custom_call.1} parent=1 // pred_fallthru
      _
    // Predicated region
    $region14: #{tpu_custom_call.1} parent=1 // pred_check
      _
    $region15: #{tpu_custom_call.1} parent=1 // pred_check_branch
      %37 = sbr.rel (0) target = $region17
    $region16: #{tpu_custom_call.1} parent=1 // pred_region
      %39 = dma.done [#allocation6], 512
    $region17: #{tpu_custom_call.1} parent=1 // pred_fallthru
      _
    %v40 = vld [vmem:[#allocation2] sm:$0xff]
    %v41 = vld [vmem:[#allocation2 + $0x8] sm:$0xff]
    %v42 = vld [vmem:[#allocation2 + $0x10] sm:$0xff]
    %v43 = vld [vmem:[#allocation2 + $0x18] sm:$0xff]
    %v44 = vld [vmem:[#allocation5] sm:$0xff]
    %v45 = vld [vmem:[#allocation5 + $0x8] sm:$0xff]
    %v46 = vld [vmem:[#allocation5 + $0x10] sm:$0xff]
    %v47 = vld [vmem:[#allocation5 + $0x18] sm:$0xff]
    %v48 = vxor.u32 %v40, 2147483648
    %v49 = vxor.u32 %v41, 2147483648
    %v50 = vxor.u32 %v42, 2147483648
    %v51 = vxor.u32 %v43, 2147483648
    %v52 = vmul.f32 %v48, 1.442695
    %v53 = vpow.pop %v52
    %v54 = vmul.f32 %v49, 1.442695
    %v55 = vpow.pop %v54
    %v56 = vmul.f32 %v50, 1.442695
    %v57 = vpow.pop %v56
    %v58 = vmul.f32 %v51, 1.442695
    %v59 = vpow.pop %v58
    %v60 = vadd.f32 %v53, 1.0
    %v61 = vadd.f32 %v55, 1.0
    %v62 = vadd.f32 %v57, 1.0
    %v63 = vadd.f32 %v59, 1.0
    %v64 = vrcp.pop %v60
    %v65 = vmul.f32 %v60, %v64
    %v66 = vsub.f32 1.0, %v65
    %v67 = vmul.f32 %v64, %v66
    %v68 = vadd.f32 %v64, %v67
    %vm69 = vweird.f32 %v60
    %vm70 = vweird.f32 %v64
    %vm71 = vmor %vm69, %vm70
    %v72 = vsel %vm71, %v64, %v68
    %v73 = vand.u32 2147483647, %v60
    %vm74 = vcmp.eq.f32.partialorder %v73, 8.507059e+37
    %v75 = vand.u32 %v60, 2147483648
    %v76 = vor.u32 1.1754944e-38, %v75
    %v77 = vsel %vm74, %v76, %v72
    %v78 = vmul.f32 1.0, %v77
    %v79 = vrcp.pop %v61
    %v80 = vmul.f32 %v61, %v79
    %v81 = vsub.f32 1.0, %v80
    %v82 = vmul.f32 %v79, %v81
    %v83 = vadd.f32 %v79, %v82
    %vm84 = vweird.f32 %v61
    %vm85 = vweird.f32 %v79
    %vm86 = vmor %vm84, %vm85
    %v87 = vsel %vm86, %v79, %v83
    %v88 = vand.u32 2147483647, %v61
    %vm89 = vcmp.eq.f32.partialorder %v88, 8.507059e+37
    %v90 = vand.u32 %v61, 2147483648
    %v91 = vor.u32 1.1754944e-38, %v90
    %v92 = vsel %vm89, %v91, %v87
    %v93 = vmul.f32 1.0, %v92
    %v94 = vrcp.pop %v62
    %v95 = vmul.f32 %v62, %v94
    %v96 = vsub.f32 1.0, %v95
    %v97 = vmul.f32 %v94, %v96
    %v98 = vadd.f32 %v94, %v97
    %vm99 = vweird.f32 %v62
    %vm100 = vweird.f32 %v94
    %vm101 = vmor %vm99, %vm100
    %v102 = vsel %vm101, %v94, %v98
    %v103 = vand.u32 2147483647, %v62
    %vm104 = vcmp.eq.f32.partialorder %v103, 8.507059e+37
    %v105 = vand.u32 %v62, 2147483648
    %v106 = vor.u32 1.1754944e-38, %v105
    %v107 = vsel %vm104, %v106, %v102
    %v108 = vmul.f32 1.0, %v107
    %v109 = vrcp.pop %v63
    %v110 = vmul.f32 %v63, %v109
    %v111 = vsub.f32 1.0, %v110
    %v112 = vmul.f32 %v109, %v111
    %v113 = vadd.f32 %v109, %v112
    %vm114 = vweird.f32 %v63
    %vm115 = vweird.f32 %v109
    %vm116 = vmor %vm114, %vm115
    %v117 = vsel %vm116, %v109, %v113
    %v118 = vand.u32 2147483647, %v63
    %vm119 = vcmp.eq.f32.partialorder %v118, 8.507059e+37
    %v120 = vand.u32 %v63, 2147483648
    %v121 = vor.u32 1.1754944e-38, %v120
    %v122 = vsel %vm119, %v121, %v117
    %v123 = vmul.f32 1.0, %v122
    %vm124 = vcmp.eq.f32.partialorder %v44, 1.0
    %vm125 = vcmp.eq.f32.partialorder %v45, 1.0
    %vm126 = vcmp.eq.f32.partialorder %v46, 1.0
    %vm127 = vcmp.eq.f32.partialorder %v47, 1.0
    %v128 = vsub.f32 1.0, %v78
    %v129 = vsub.f32 1.0, %v93
    %v130 = vsub.f32 1.0, %v108
    %v131 = vsub.f32 1.0, %v123
    %v132 = vsel %vm124, %v128, %v78
    %v133 = vsel %vm125, %v129, %v93
    %v134 = vsel %vm126, %v130, %v108
    %v135 = vsel %vm127, %v131, %v123
    %v136 = vmul.f32 %v132, %v132
    %v137 = vmul.f32 %v133, %v133
    %v138 = vmul.f32 %v134, %v134
    %v139 = vmul.f32 %v135, %v135
    %v140 = vmul.f32 %v136, 0.5
    %v141 = vmul.f32 %v137, 0.5
    %v142 = vmul.f32 %v138, 0.5
    %v143 = vmul.f32 %v139, 0.5
    %v144 = vadd.f32 %v78, 1e-05
    %v145 = vadd.f32 %v93, 1e-05
    %v146 = vadd.f32 %v108, 1e-05
    %v147 = vadd.f32 %v123, 1e-05
    %v148 = vlog2.pop %v144
    %v149 = vmul.f32 %v148, 0.6931472
    %v150 = vlog2.pop %v145
    %v151 = vmul.f32 %v150, 0.6931472
    %v152 = vlog2.pop %v146
    %v153 = vmul.f32 %v152, 0.6931472
    %v154 = vlog2.pop %v147
    %v155 = vmul.f32 %v154, 0.6931472
    %v156 = vmul.f32 %v44, %v149
    %v157 = vmul.f32 %v45, %v151
    %v158 = vmul.f32 %v46, %v153
    %v159 = vmul.f32 %v47, %v155
    %v160 = vsub.f32 1.0, %v44
    %v161 = vsub.f32 1.0, %v45
    %v162 = vsub.f32 1.0, %v46
    %v163 = vsub.f32 1.0, %v47
    %v164 = vadd.f32 %v128, 1e-05
    %v165 = vadd.f32 %v129, 1e-05
    %v166 = vadd.f32 %v130, 1e-05
    %v167 = vadd.f32 %v131, 1e-05
    %v168 = vlog2.pop %v164
    %v169 = vmul.f32 %v168, 0.6931472
    %v170 = vlog2.pop %v165
    %v171 = vmul.f32 %v170, 0.6931472
    %v172 = vlog2.pop %v166
    %v173 = vmul.f32 %v172, 0.6931472
    %v174 = vlog2.pop %v167
    %v175 = vmul.f32 %v174, 0.6931472
    %v176 = vmul.f32 %v160, %v169
    %v177 = vmul.f32 %v161, %v171
    %v178 = vmul.f32 %v162, %v173
    %v179 = vmul.f32 %v163, %v175
    %v180 = vadd.f32 %v156, %v176
    %v181 = vadd.f32 %v157, %v177
    %v182 = vadd.f32 %v158, %v178
    %v183 = vadd.f32 %v159, %v179
    %v184 = vsub.f32 0.0, %v180
    %v185 = vsub.f32 0.0, %v181
    %v186 = vsub.f32 0.0, %v182
    %v187 = vsub.f32 0.0, %v183
    %v188 = vmul.f32 %v140, %v184
    %v189 = vmul.f32 %v141, %v185
    %v190 = vmul.f32 %v142, %v186
    %v191 = vmul.f32 %v143, %v187
    %v192 = vlaneseq
    %v193 = vshrl.u32 %v192, 7
    %v194 = vlaneseq
    %v195 = vand.u32 %v194, 127
    %v196 = vadd.s32 %v195, 128
    %v197 = vadd.s32 %v195, 256
    %v198 = vadd.s32 %v195, 384
    %s199 = smul.u32 0, 8
    %v200 = vstv %s199
    %v201 = vadd.s32 %v200, %v193
    %v202 = vmul.u32 %v201, 512
    %v203 = vadd.s32 %v202, %v195
    %v204 = vadd.s32 %v202, %v196
    %v205 = vadd.s32 %v202, %v197
    %v206 = vadd.s32 %v202, %v198
    %vm207 = vcmp.lt.s32.totalorder %v203, 2048
    %vm208 = vcmp.lt.s32.totalorder %v204, 2048
    %vm209 = vcmp.lt.s32.totalorder %v205, 2048
    %vm210 = vcmp.lt.s32.totalorder %v206, 2048
    %v211 = vsel %vm207, %v188, 0.0
    %v212 = vsel %vm208, %v189, 0.0
    %v213 = vsel %vm209, %v190, 0.0
    %v214 = vsel %vm210, %v191, 0.0
    %215 = vst [vmem:[#allocation7] sm:$0xff] %v211
    %216 = vst [vmem:[#allocation7 + $0x8] sm:$0xff] %v212
    %217 = vst [vmem:[#allocation7 + $0x10] sm:$0xff] %v213
    %218 = vst [vmem:[#allocation7 + $0x18] sm:$0xff] %v214
    // Predicated region
    $region18: #{tpu_custom_call.1} parent=1 // pred_check
      _
    $region19: #{tpu_custom_call.1} parent=1 // pred_check_branch
      %220 = sbr.rel (0) target = $region21
    $region20: #{tpu_custom_call.1} parent=1 // pred_region
      %222 = vsyncadd [#allocation4], 0
      %s224 = sshll.u32 [#allocation7], 4
      %s225 = int_to_ptr.vmem [resolvable:$true] %s224
      %s226 = sshll.u32 %s2, 4
      %s227 = int_to_ptr.hbm [resolvable:$true] %s226
      %229 = dma.vmem_to_hbm [thread:$0]  %s225, 512, %s227, [#allocation4]
    $region21: #{tpu_custom_call.1} parent=1 // pred_fallthru
      _
    // Predicated region
    $region22: #{tpu_custom_call.1} parent=1 // pred_check
      _
    $region23: #{tpu_custom_call.1} parent=1 // pred_check_branch
      %231 = sbr.rel (0) target = $region25
    $region24: #{tpu_custom_call.1} parent=1 // pred_region
      %233 = dma.done [#allocation4], 512
    $region25: #{tpu_custom_call.1} parent=1 // pred_fallthru
      _
    %234 = vsyncpa [#allocation3], 1
    %235 = vsyncpa [#allocation6], 1
    %236 = vsyncpa [#allocation4], 1

</llo_original>
